<compile_context>
chip_gen: v6e
topology: v6e:2x2x1
jax: 0.10.0
libtpu: 0.0.40
codegen_flags: <defaults>
</compile_context>

<pallas_src>
import functools
import itertools

import numpy as np
import jax
import jax.numpy as jnp
from jax.experimental import pallas as pl
from jax.experimental.pallas import tpu as pltpu


# ----------------------------- helpers --------------------------------------

def _pick_tile(dim, max_tile):
    """Largest power-of-two-ish tile <= max_tile that divides dim (else full)."""
    if dim <= max_tile:
        return dim
    t = max_tile
    while t >= 8:
        if dim % t == 0:
            return t
        t //= 2
    return dim


# --------------------------- Pallas kernels ---------------------------------

def _matmul_kernel(a_ref, b_ref, o_ref):
    o_ref[...] = jnp.dot(a_ref[...], b_ref[...],
                         preferred_element_type=jnp.float32).astype(o_ref.dtype)


def pallas_matmul(a, b, out_dtype=jnp.bfloat16, tm_max=512, tn_max=4096):
    """a: [M,K] bf16, b: [K,N] bf16 -> [M,N] out_dtype.  Weight (b) is placed on
    the OUTER grid axis so it is DMA'd exactly once (weight-stationary)."""
    M, K = a.shape
    K2, Nc = b.shape
    assert K == K2
    tm = _pick_tile(M, tm_max)
    tn = _pick_tile(Nc, tn_max)
    grid = (Nc // tn, M // tm)          # j (weight tiles) outer, i (rows) inner
    return pl.pallas_call(
        _matmul_kernel,
        out_shape=jax.ShapeDtypeStruct((M, Nc), out_dtype),
        grid=grid,
        in_specs=[pl.BlockSpec((tm, K), lambda j, i: (i, 0)),
                  pl.BlockSpec((K, tn), lambda j, i: (0, j))],
        out_specs=pl.BlockSpec((tm, tn), lambda j, i: (i, j)),
        compiler_params=pltpu.CompilerParams(
            dimension_semantics=("parallel", "parallel")),
    )(a, b)


def _bn_stats_kernel(x_ref, sum_ref, sq_ref):
    @pl.when(pl.program_id(0) == 0)
    def _():
        sum_ref[...] = jnp.zeros_like(sum_ref)
        sq_ref[...] = jnp.zeros_like(sq_ref)
    x = x_ref[...].astype(jnp.float32)
    sum_ref[...] += jnp.sum(x, axis=0, keepdims=True)
    sq_ref[...] += jnp.sum(x * x, axis=0, keepdims=True)


def pallas_bn_stats(x, tr_max=512):
    """x: [R, L] -> per-lane (sum, sum of squares), accumulated over row tiles.
    R always divides exactly (no padding rows)."""
    R, L = x.shape
    tr = _pick_tile(R, tr_max)
    return pl.pallas_call(
        _bn_stats_kernel,
        out_shape=(jax.ShapeDtypeStruct((1, L), jnp.float32),
                   jax.ShapeDtypeStruct((1, L), jnp.float32)),
        grid=(R // tr,),
        in_specs=[pl.BlockSpec((tr, L), lambda i: (i, 0))],
        out_specs=(pl.BlockSpec((1, L), lambda i: (0, 0)),
                   pl.BlockSpec((1, L), lambda i: (0, 0))),
        compiler_params=pltpu.CompilerParams(dimension_semantics=("arbitrary",)),
    )(x)


def _affine_act_kernel(x_ref, scale_ref, shift_ref, o_ref, *, act):
    y = x_ref[...].astype(jnp.float32) * scale_ref[...] + shift_ref[...]
    if act == "relu":
        y = jnp.maximum(y, 0.0)
    elif act == "tanh":
        y = jnp.tanh(y)
    elif act == "sigmoid":
        y = 1.0 / (1.0 + jnp.exp(-y))
    o_ref[...] = y.astype(o_ref.dtype)


def pallas_affine_act(x, scale, shift, act, out_dtype, tr_max=512):
    """x: [R, L]; per-lane scale/shift [1, L]; fused activation; lane-dense."""
    R, L = x.shape
    tr = _pick_tile(R, tr_max)
    return pl.pallas_call(
        functools.partial(_affine_act_kernel, act=act),
        out_shape=jax.ShapeDtypeStruct((R, L), out_dtype),
        grid=(R // tr,),
        in_specs=[pl.BlockSpec((tr, L), lambda i: (i, 0)),
                  pl.BlockSpec((1, L), lambda i: (0, 0)),
                  pl.BlockSpec((1, L), lambda i: (0, 0))],
        out_specs=pl.BlockSpec((tr, L), lambda i: (i, 0)),
        compiler_params=pltpu.CompilerParams(dimension_semantics=("parallel",)),
    )(x, scale.astype(jnp.float32), shift.astype(jnp.float32))


def _blend_kernel(m_ref, f_ref, b_ref, o_ref):
    m = m_ref[...]
    o_ref[...] = m * f_ref[...] + (1.0 - m) * b_ref[...]


def pallas_blend_cf(m_cf, f_cf, b_cf):
    """Channel-first, lane-dense blend.
    m_cf: [N,1,D,HW], f_cf: [N,C,D,HW], b_cf: [N,C,1,HW] -> [N,C,D,HW]."""
    N, C, D, HW = f_cf.shape
    return pl.pallas_call(
        _blend_kernel,
        out_shape=jax.ShapeDtypeStruct((N, C, D, HW), jnp.float32),
        grid=(N, C),
        in_specs=[pl.BlockSpec((1, 1, D, HW), lambda n, c: (n, 0, 0, 0)),
                  pl.BlockSpec((1, 1, D, HW), lambda n, c: (n, c, 0, 0)),
                  pl.BlockSpec((1, 1, 1, HW), lambda n, c: (n, c, 0, 0))],
        out_specs=pl.BlockSpec((1, 1, D, HW), lambda n, c: (n, c, 0, 0)),
        compiler_params=pltpu.CompilerParams(
            dimension_semantics=("parallel", "parallel")),
    )(m_cf, f_cf, b_cf)


# ------------- ConvTranspose (k=4, s=2, p=1) via sub-pixel phases -----------
#
# out[2j + r] = sum_b  x[j + off(r,b)] @ W[kt(r,b)]   per spatial dim, with
#   r=0: kt = 2b+1, off = -b ;  r=1: kt = 2-2b, off = +b      (b in {0,1})
# One matmul produces col[M, phase, tap, Cout]; each phase output is a dense
# sum of statically shifted tap slices (written once, no RMW), then phases are
# interleaved with a single reshape/transpose.

def reorder_weight_s2(w):
    """w: PyTorch layout [Cin, Cout, *k] (k=4 each) -> [Cin, P*P*Cout]
    with (phase, tap, cout) minor order, P = 2^nd."""
    nd = w.ndim - 2
    cin = w.shape[0]
    cols = []
    for r in itertools.product((0, 1), repeat=nd):
        for b in itertools.product((0, 1), repeat=nd):
            kt = tuple((2 * bb + 1) if rr == 0 else (2 - 2 * bb)
                       for rr, bb in zip(r, b))
            cols.append(w[(slice(None), slice(None)) + kt])      # [Cin, Cout]
    wr = jnp.stack(cols, axis=1)                                 # [Cin, P*P, Cout]
    return wr.reshape(cin, -1)


def first_layer_mat(w):
    """Stride-1, pad-0 transposed conv on a 1x1(x1) input is a plain matmul:
    w [Cin, Cout, *k] -> [Cin, prod(k)*Cout] bf16 (tap-major, cout minor)."""
    nd = w.ndim - 2
    perm = (0,) + tuple(range(2, 2 + nd)) + (1,)
    return jnp.transpose(w, perm).reshape(w.shape[0], -1).astype(jnp.bfloat16)


def _shift_zero(t, axis, direction, size):
    """direction -1: out[j]=t[j-1] (zero at 0); +1: out[j]=t[j+1] (zero at end)."""
    pad_cfg = [(0, 0)] * t.ndim
    idx = [slice(None)] * t.ndim
    if direction < 0:
        pad_cfg[axis] = (1, 0)
        idx[axis] = slice(0, size)
    else:
        pad_cfg[axis] = (0, 1)
        idx[axis] = slice(1, size + 1)
    return jnp.pad(t, pad_cfg)[tuple(idx)]


def _combine_phases(col, spatial_in, cout, out_dtype):
    """col: [N, *I, P(phase), P(tap), C] -> [N, *(2*I), C] (dense writes only)."""
    nd = len(spatial_in)
    N = col.shape[0]
    outs = []
    for ri, r in enumerate(itertools.product((0, 1), repeat=nd)):
        acc = None
        for bi, b in enumerate(itertools.product((0, 1), repeat=nd)):
            t = col[(slice(None),) * (1 + nd) + (ri, bi)].astype(jnp.float32)
            for d in range(nd):
                if b[d]:
                    t = _shift_zero(t, 1 + d, -1 if r[d] == 0 else +1,
                                    spatial_in[d])
            acc = t if acc is None else acc + t
        outs.append(acc)
    stacked = jnp.stack(outs, axis=1)                            # [N, P, *I, C]
    stacked = stacked.reshape((N,) + (2,) * nd + tuple(spatial_in) + (cout,))
    perm = [0]
    for d in range(nd):
        perm += [1 + nd + d, 1 + d]
    perm.append(1 + 2 * nd)
    stacked = jnp.transpose(stacked, perm)
    out_sp = tuple(2 * s for s in spatial_in)
    return stacked.reshape((N,) + out_sp + (cout,)).astype(out_dtype)


def conv_transpose_s2_from_mat(x, w_mat, cout, out_dtype=jnp.float32):
    """x: [N, *I, Cin] channels-last; w_mat: [Cin, P*P*Cout] bf16 (pre-packed)."""
    spatial_in = x.shape[1:-1]
    N, cin = x.shape[0], x.shape[-1]
    nd = len(spatial_in)
    P = 2 ** nd
    M = N * int(np.prod(spatial_in))
    assert w_mat.shape == (cin, P * P * cout)
    col = pallas_matmul(x.reshape(M, cin).astype(jnp.bfloat16), w_mat,
                        out_dtype=jnp.bfloat16)
    col = col.reshape((N,) + tuple(spatial_in) + (P, P, cout))
    return _combine_phases(col, spatial_in, cout, out_dtype)


def conv_transpose_s2(x, w_pt, out_dtype=jnp.float32):
    """Convenience path taking a PyTorch-layout weight (used by self-checks)."""
    w_mat = reorder_weight_s2(w_pt).astype(jnp.bfloat16)
    return conv_transpose_s2_from_mat(x, w_mat, w_pt.shape[1], out_dtype)


def conv_transpose_full(z, w_mat, ksize, cout):
    """First layer (1x1(x1) input, stride 1, pad 0): pure matmul."""
    col = pallas_matmul(z.astype(jnp.bfloat16), w_mat, out_dtype=jnp.float32)
    return col.reshape((z.shape[0],) + tuple(ksize) + (cout,))


# -------------------------- brute-force references --------------------------

def _reference_conv_transpose_2d(x, w, stride, pad):
    x, w = np.asarray(x, np.float32), np.asarray(w, np.float32)
    N, H, W, Cin = x.shape
    _, Cout, kh, kw = w.shape
    OH = (H - 1) * stride[0] - 2 * pad[0] + kh
    OW = (W - 1) * stride[1] - 2 * pad[1] + kw
    out = np.zeros((N, OH, OW, Cout), np.float32)
    for n in range(N):
        for ih in range(H):
            for iw in range(W):
                for a in range(kh):
                    for bb in range(kw):
                        oh = ih * stride[0] - pad[0] + a
                        ow = iw * stride[1] - pad[1] + bb
                        if 0 <= oh < OH and 0 <= ow < OW:
                            out[n, oh, ow, :] += x[n, ih, iw, :] @ w[:, :, a, bb]
    return out


def _reference_conv_transpose_3d(x, w, stride, pad):
    x, w = np.asarray(x, np.float32), np.asarray(w, np.float32)
    N, D, H, W, Cin = x.shape
    _, Cout, kd, kh, kw = w.shape
    OD = (D - 1) * stride[0] - 2 * pad[0] + kd
    OH = (H - 1) * stride[1] - 2 * pad[1] + kh
    OW = (W - 1) * stride[2] - 2 * pad[2] + kw
    out = np.zeros((N, OD, OH, OW, Cout), np.float32)
    for n in range(N):
        for idd in range(D):
            for ih in range(H):
                for iw in range(W):
                    v = x[n, idd, ih, iw]
                    for a in range(kd):
                        for bb in range(kh):
                            for c in range(kw):
                                od = idd * stride[0] - pad[0] + a
                                oh = ih * stride[1] - pad[1] + bb
                                ow = iw * stride[2] - pad[2] + c
                                if 0 <= od < OD and 0 <= oh < OH and 0 <= ow < OW:
                                    out[n, od, oh, ow] += v @ w[:, :, a, bb, c]
    return out


# ------------------------------- layers -------------------------------------

def _bn_relu(y, gamma, beta):
    """Training-mode BatchNorm + ReLU.  The ConvTranspose bias shifts every
    element of a channel equally, so it cancels exactly inside batch-stat BN
    (and is 0 under the module init) -> folded away (bit-equivalent math).
    Lane-dense layout: rows = N*(leading spatial), lanes = W*C (=2048 here)."""
    shp = y.shape
    C, Wlast = shp[-1], shp[-2]
    rows = int(np.prod(shp[:-2]))
    L = Wlast * C
    y2 = y.reshape(rows, L)
    s, sq = pallas_bn_stats(y2)
    cnt = float(rows * Wlast)
    mean = s.reshape(Wlast, C).sum(0) / cnt
    ex2 = sq.reshape(Wlast, C).sum(0) / cnt
    var = jnp.maximum(ex2 - mean * mean, 0.0)        # guard tiny negative values
    invstd = 1.0 / jnp.sqrt(var + 1e-5)
    scale_c = gamma * invstd
    shift_c = beta - mean * scale_c
    scale = jnp.tile(scale_c, Wlast).reshape(1, L)
    shift = jnp.tile(shift_c, Wlast).reshape(1, L)
    out = pallas_affine_act(y2, scale, shift, "relu", out_dtype=jnp.bfloat16)
    return out.reshape(shp)                          # bf16, feeds next matmul


def _bias_act(y, bias, act):
    """Head layers (tanh / sigmoid): lane-dense over the last 3 dims (H*W*C)."""
    shp = y.shape
    rows = int(np.prod(shp[:-3]))
    L = int(np.prod(shp[-3:]))
    reps = int(np.prod(shp[-3:-1]))
    scale = jnp.ones((1, L), jnp.float32)
    shift = jnp.tile(bias.astype(jnp.float32), reps).reshape(1, L)
    out = pallas_affine_act(y.reshape(rows, L), scale, shift, act,
                            out_dtype=jnp.float32)
    return out.reshape(shp)


def init_params(key, zdim):
    keys = iter(jax.random.split(key, 64))
    convw = lambda cin, cout, k: 0.01 * jax.random.normal(
        next(keys), (cin, cout) + tuple(k), jnp.float32)          # N(0, 0.01)
    bnw = lambda c: 1.0 + 0.02 * jax.random.normal(next(keys), (c,), jnp.float32)
    zeros = lambda c: jnp.zeros((c,), jnp.float32)
    p = {}
    # 2-D branch ("b")
    for i, (cin, cout, k) in enumerate(
            [(zdim, 512, (4, 4)), (512, 256, (4, 4)), (256, 128, (4, 4)),
             (128, 64, (4, 4)), (64, 3, (4, 4))], start=1):
        w = convw(cin, cout, k)
        p[f'w{i}b_mat'] = (first_layer_mat(w) if i == 1
                           else reorder_weight_s2(w).astype(jnp.bfloat16))
        if i < 5:
            p[f'g{i}b'], p[f'be{i}b'] = bnw(cout), zeros(cout)
        else:
            p['bias5b'] = zeros(cout)
    # 3-D branch ("f")
    for i, (cin, cout, k) in enumerate(
            [(zdim, 512, (2, 4, 4)), (512, 256, (4, 4, 4)), (256, 128, (4, 4, 4)),
             (128, 64, (4, 4, 4)), (64, 3, (4, 4, 4))], start=1):
        w = convw(cin, cout, k)
        p[f'w{i}_mat'] = (first_layer_mat(w) if i == 1
                          else reorder_weight_s2(w).astype(jnp.bfloat16))
        if i < 5:
            p[f'g{i}'], p[f'be{i}'] = bnw(cout), zeros(cout)
        else:
            p['bias5'] = zeros(cout)
    w5m = convw(64, 1, (4, 4, 4))
    p['w5m_mat'] = reorder_weight_s2(w5m).astype(jnp.bfloat16)
    p['bias5m'] = zeros(1)
    return p


def generator_forward(p, z):
    N = z.shape[0]
    # ---- 2-D branch ("b") ----
    b = conv_transpose_full(z, p['w1b_mat'], (4, 4), 512)
    b = _bn_relu(b, p['g1b'], p['be1b'])
    b = conv_transpose_s2_from_mat(b, p['w2b_mat'], 256)
    b = _bn_relu(b, p['g2b'], p['be2b'])
    b = conv_transpose_s2_from_mat(b, p['w3b_mat'], 128)
    b = _bn_relu(b, p['g3b'], p['be3b'])
    b = conv_transpose_s2_from_mat(b, p['w4b_mat'], 64)
    b = _bn_relu(b, p['g4b'], p['be4b'])
    b = conv_transpose_s2_from_mat(b, p['w5b_mat'], 3)
    b = _bias_act(b, p['bias5b'], "tanh")                 # [N,64,64,3] f32
    # ---- 3-D branch ("f") ----
    f = conv_transpose_full(z, p['w1_mat'], (2, 4, 4), 512)
    f = _bn_relu(f, p['g1'], p['be1'])
    f = conv_transpose_s2_from_mat(f, p['w2_mat'], 256)
    f = _bn_relu(f, p['g2'], p['be2'])
    f = conv_transpose_s2_from_mat(f, p['w3_mat'], 128)
    f = _bn_relu(f, p['g3'], p['be3'])
    f = conv_transpose_s2_from_mat(f, p['w4_mat'], 64)
    f4 = _bn_relu(f, p['g4'], p['be4'])                   # [N,16,32,32,64] bf16
    m = conv_transpose_s2_from_mat(f4, p['w5m_mat'], 1)
    m = _bias_act(m, p['bias5m'], "sigmoid")              # [N,32,64,64,1]
    f = conv_transpose_s2_from_mat(f4, p['w5_mat'], 3)
    f = _bias_act(f, p['bias5'], "tanh")                  # [N,32,64,64,3]
    # ---- lane-dense channel-first blend (out produced directly in NCDHW) ----
    Dd, H, W = f.shape[1:4]
    f_cf = jnp.transpose(f, (0, 4, 1, 2, 3)).reshape(N, 3, Dd, H * W)
    m_cf = jnp.transpose(m, (0, 4, 1, 2, 3)).reshape(N, 1, Dd, H * W)
    b_cf = jnp.transpose(b, (0, 3, 1, 2)).reshape(N, 3, 1, H * W)
    out = pallas_blend_cf(m_cf, f_cf, b_cf).reshape(N, 3, Dd, H, W)
    return (out,
            f_cf.reshape(N, 3, Dd, H, W),
            b_cf.reshape(N, 3, 1, H, W),
            m_cf.reshape(N, 1, Dd, H, W))


if __name__ == "__main__":
    zdim = 16   # stand-in for args.zd
    N = 2
    key = jax.random.PRNGKey(0)
    k_z, k_p, k_cx, k_cw, k_cx3, k_cw3 = jax.random.split(key, 6)

    # tiny brute-force checks of the phase-decomposed transposed conv
    # (loose tolerance: matmul operands / col buffer are bf16)
    x2 = jax.random.normal(k_cx, (1, 3, 3, 2), jnp.float32)
    w2 = jax.random.normal(k_cw, (2, 3, 4, 4), jnp.float32)
    got2 = np.asarray(conv_transpose_s2(x2, w2))
    want2 = _reference_conv_transpose_2d(x2, w2, (2, 2), (1, 1))
    np.testing.assert_allclose(got2, want2, rtol=5e-2,
                               atol=5e-2 * float(np.abs(want2).max()))

    x3 = jax.random.normal(k_cx3, (1, 2, 3, 2, 2), jnp.float32)
    w3 = jax.random.normal(k_cw3, (2, 3, 4, 4, 4), jnp.float32)
    got3 = np.asarray(conv_transpose_s2(x3, w3))
    want3 = _reference_conv_transpose_3d(x3, w3, (2, 2, 2), (1, 1, 1))
    np.testing.assert_allclose(got3, want3, rtol=5e-2,
                               atol=5e-2 * float(np.abs(want3).max()))

    params = init_params(k_p, zdim)
    z = jax.random.normal(k_z, (N, zdim), jnp.float32)

    fwd = jax.jit(generator_forward)
    out, f, bb, m = fwd(params, z)
    jax.block_until_ready((out, f, bb, m))

    assert out.shape == (N, 3, 32, 64, 64)
    assert f.shape == (N, 3, 32, 64, 64)
    assert bb.shape == (N, 3, 1, 64, 64)
    assert m.shape == (N, 1, 32, 64, 64)
    assert bool(jnp.all(jnp.isfinite(out)))
    print("KERNEL_OK")
</pallas_src>

<mosaic_0001>
module attributes {stable_mosaic.version = 11 : i64} {
  func.func @_matmul_kernel(%arg0: i32, %arg1: i32, %arg2: memref<9x2xbf16, #tpu.memory_space<vmem>>, %arg3: memref<2x48xbf16, #tpu.memory_space<vmem>>, %arg4: memref<9x48xbf16, #tpu.memory_space<vmem>>) attributes {dimension_semantics = [#tpu.dimension_semantics<parallel>, #tpu.dimension_semantics<parallel>], iteration_bounds = array<i64: 1, 1>, scalar_prefetch = 0 : i64, scratch_operands = 0 : i64, tpu.core_type = #tpu.core_type<tc>, window_params = [{transform_indices = @transform_0, window_bounds = array<i64: 9, 2>}, {transform_indices = @transform_1, window_bounds = array<i64: 2, 48>}, {transform_indices = @transform_2, window_bounds = array<i64: 9, 48>}]} {
    %c0 = arith.constant 0 : index
    %c0_0 = arith.constant 0 : index
    %0 = vector.load %arg2[%c0, %c0_0] : memref<9x2xbf16, #tpu.memory_space<vmem>>, vector<9x2xbf16>
    %c0_1 = arith.constant 0 : index
    %c0_2 = arith.constant 0 : index
    %1 = vector.load %arg3[%c0_1, %c0_2] : memref<2x48xbf16, #tpu.memory_space<vmem>>, vector<2x48xbf16>
    %cst = arith.constant dense<0.000000e+00> : vector<9x48xf32>
    %2 = tpu.matmul %0, %1, %cst {dimension_numbers = #tpu.dot_dimension_numbers<[1], [0], [0], [1], [0, 0, 1, 1], [], []>} : vector<9x2xbf16>, vector<2x48xbf16>, vector<9x48xf32> -> vector<9x48xf32>
    %3 = arith.truncf %2 : vector<9x48xf32> to vector<9x48xbf16>
    %c0_3 = arith.constant 0 : index
    %c0_4 = arith.constant 0 : index
    %4 = vector.load %arg4[%c0_3, %c0_4] : memref<9x48xbf16, #tpu.memory_space<vmem>>, vector<9x48xbf16>
    tpu.vector_store %arg4[%c0_3, %c0_4], %3 {strides = array<i32>} : memref<9x48xbf16, #tpu.memory_space<vmem>>, vector<9x48xbf16>,
    return
  }
  func.func @transform_0(%arg0: i32, %arg1: i32) -> (i32, i32) {
    %c0_i32 = arith.constant 0 : i32
    %c0_i32_0 = arith.constant 0 : i32
    return %arg1, %c0_i32 : i32, i32
  }
  func.func @transform_1(%arg0: i32, %arg1: i32) -> (i32, i32) {
    %c0_i32 = arith.constant 0 : i32
    %c0_i32_0 = arith.constant 0 : i32
    return %c0_i32, %arg0 : i32, i32
  }
  func.func @transform_2(%arg0: i32, %arg1: i32) -> (i32, i32) {
    %c0_i32 = arith.constant 0 : i32
    return %arg1, %arg0 : i32, i32
  }
}

</mosaic_0001>

<llo_original>
// kernel: tpu_custom_call.1
$region0: #{tpu_custom_call.1}
  #allocation0 [shape = 'u32[]', space=smem, size = 0x4, offset = 0x4, fixed_abs, tag = 'smem constant byte address 0x4 - core index']
  #allocation1 [shape = 'u32[144,128]{1,0:T(1,128)}', space=vmem, size = 0x12000, scoped, tag = 'internal scratch']
  %s0 = inlined_call_operand.vmem [shape: bf16[9,2], index: 0, kind: input, shape index: {}]
  %s1 = inlined_call_operand.vmem [shape: bf16[2,48], index: 1, kind: input, shape index: {}]
  %s2 = inlined_call_operand.hbm [shape: bf16[9,48], index: 2, kind: output, shape index: {}]
  %s3 = sld [smem:[#allocation0]]
  $region18: #{tpu_custom_call.1} parent=0
    _
  %s5 = ssub.s32 1, %s3
  %s6 = scalar_select 0, %s5, %s3
  $region1: #{tpu_custom_call.1} parent=0
    #allocation2 [shape = 'u8[4096]{0}', space=vmem, size = 0x1000, scoped, tag = 'output window, operand 0, single buffered']
    #allocation3 [shape = 's32[1]{0}', space=sflag, size = 0x4, scoped, tag = 'scoped memory for tpu_custom_call.1']
    %7 = vsyncpa [#allocation3], 0
    // Predicated region
    $region2: #{tpu_custom_call.1} parent=1 // pred_check
      _
    $region3: #{tpu_custom_call.1} parent=1 // pred_check_branch
      %9 = sbr.rel (0) target = $region5
    $region4: #{tpu_custom_call.1} parent=1 // pred_region
      _
    $region5: #{tpu_custom_call.1} parent=1 // pred_fallthru
      _
    // Predicated region
    $region6: #{tpu_custom_call.1} parent=1 // pred_check
      _
    $region7: #{tpu_custom_call.1} parent=1 // pred_check_branch
      %11 = sbr.rel (0) target = $region9
    $region8: #{tpu_custom_call.1} parent=1 // pred_region
      _
    $region9: #{tpu_custom_call.1} parent=1 // pred_fallthru
      _
    %v13 = vld [vmem:[%s0] sm:$0xf]
    %v14 = vld [vmem:[%s0 + $0x4] sm:$0x1]
    %v15 = vld [vmem:[%s1] sm:$0x1]
    %v18 = vunpack.c.l.b16 %v13
    %v19 = vunpack.c.l.b16 %v14
    %v20 = vpack.c.b16 %v19, %v18
    %vm21 = vcmask 15360
    %v23 = vsel %vm21, %v20, 0
    %vm25 = vcmask 1040384
    %v27 = vsel %vm25, %v15, 0
    %29 = vmatprep.subr.bf16.mxu0 0
    %30 = vmatpush1.bf16.msra.mxu0 0
    %31 = vmatprep.subr.bf16.mxu0 0
    %32 = vmatpush1.bf16.msra.mxu0 0
    %33 = vmatprep.subr.bf16.mxu0 0
    %34 = vmatpush1.bf16.msra.mxu0 0
    %35 = vmatprep.subr.bf16.mxu0 0
    %36 = vmatpush1.bf16.msra.mxu0 0
    %37 = vmatprep.subr.bf16.mxu0 0
    %38 = vmatpush1.bf16.msra.mxu0 0
    %39 = vmatprep.subr.bf16.mxu0 0
    %40 = vmatpush1.bf16.msra.mxu0 0
    %41 = vmatprep.subr.bf16.mxu0 0
    %42 = vmatpush1.bf16.msra.mxu0 0
    %43 = vmatprep.subr.bf16.mxu0 0
    %44 = vmatpush1.bf16.msra.mxu0 %v27
    %45 = vmatprep.subr.bf16.mxu0 0
    %46 = vmatpush2.bf16.msra.mxu0 0
    %47 = vmatprep.subr.bf16.mxu0 0
    %48 = vmatpush2.bf16.msra.mxu0 0
    %49 = vmatprep.subr.bf16.mxu0 0
    %50 = vmatpush2.bf16.msra.mxu0 0
    %51 = vmatprep.subr.bf16.mxu0 0
    %52 = vmatpush2.bf16.msra.mxu0 0
    %53 = vmatprep.subr.bf16.mxu0 0
    %54 = vmatpush2.bf16.msra.mxu0 0
    %55 = vmatprep.subr.bf16.mxu0 0
    %56 = vmatpush2.bf16.msra.mxu0 0
    %57 = vmatprep.subr.bf16.mxu0 0
    %58 = vmatpush2.bf16.msra.mxu0 0
    %59 = vmatprep.subr.bf16.mxu0 0
    %60 = vmatpush2.bf16.msra.mxu0 0
    %61 = vmatprep.mubr.bf16.mxu0 0
    %62 = vmatmul.mubr.bf16.gmra.mxu0 %v23
    %v63 = vpop.f32.mrf.mxu0
    %v64 = vadd.f32 0.0, %v63
    %v65 = vpop.f32.mrf.mxu0
    %v66 = vpop.f32.mrf.mxu0
    %v67 = vadd.f32 0.0, %v66
    %v68 = vpop.f32.mrf.mxu0
    %69 = vdwg.mxu0
    %v70 = vpack.c.bf16 %v67, %v64
    %v72 = vunpack.c.l.b16 %v70
    %v73 = vunpack.c.h.b16 %v70
    %v74 = vpack.c.b16 %v72, %v72
    %v75 = vpack.c.b16 %v73, %v73
    %vm78 = vcmask 388096
    %79 = vst.msk [vmem:[#allocation2] sm:$0xf] %vm78, %v74
    %vm80 = vcmask 385024
    %vm81 = vsmask.f32 256
    %vm82 = vmand %vm80, %vm81
    %v83 = vld [vmem:[#allocation2 + $0x4] sm:$0x1]
    %v84 = vsel %vm82, %v75, %v83
    %85 = vst [vmem:[#allocation2 + $0x4] sm:$0x1] %v84
    // Predicated region
    $region10: #{tpu_custom_call.1} parent=1 // pred_check
      _
    $region11: #{tpu_custom_call.1} parent=1 // pred_check_branch
      %87 = sbr.rel (0) target = $region13
    $region12: #{tpu_custom_call.1} parent=1 // pred_region
      %s89 = ssub.s32 128, 128
      %90 = vsyncadd [#allocation3], %s89
      %s91 = sshll.u32 [#allocation2], 4
      %s92 = int_to_ptr.vmem [resolvable:$true] %s91
      %97 = dma.vmem_to_hbm [thread:$0]  %s92, 128, %s2, [#allocation3], 64, 64, 4
    $region13: #{tpu_custom_call.1} parent=1 // pred_fallthru
      _
    // Predicated region
    $region14: #{tpu_custom_call.1} parent=1 // pred_check
      _
    $region15: #{tpu_custom_call.1} parent=1 // pred_check_branch
      %99 = sbr.rel (0) target = $region17
    $region16: #{tpu_custom_call.1} parent=1 // pred_region
      %100 = dma.done [#allocation3], 128
    $region17: #{tpu_custom_call.1} parent=1 // pred_fallthru
      _
    %101 = vsyncpa [#allocation3], 1

</llo_original>
